<compile_context>
chip_gen: v7x
topology: tpu7x:2x2x1
jax: 0.10.0
libtpu: 0.0.40
codegen_flags: <defaults>
</compile_context>

<pallas_src>
import jax
import jax.numpy as jnp
from jax.experimental import pallas as pl
from jax.experimental.pallas import tpu as pltpu


# Lane widths tried in order (all multiples of 128 -> unmasked, lane-dense vst).
_LANE_CANDIDATES = (1024, 512, 256, 128)
# Per-buffer tile budget.  2 arrays (in+out) x 2 (double buffer) x 2 MiB = 8 MiB
# live VMEM: portable across v5e (16 MiB scoped), v6e (32 MiB), v7x (64 MiB phys).
_TARGET_TILE_BYTES = 2 * 1024 * 1024


def _identity_kernel(x_ref, o_ref):
    # Pure copy through VMEM: the abstract forward() has no compute.
    o_ref[...] = x_ref[...]


def _pick_lane(total: int):
    """Largest lane width (multiple of 128) that divides the element count."""
    for lane in _LANE_CANDIDATES:
        if total % lane == 0:
            return lane
    return None


def _pick_tile_rows(rows: int, lane: int, itemsize: int):
    """Tile row count: multiple of 8, divides `rows`, <= ~2 MiB per buffer."""
    max_rows = (_TARGET_TILE_BYTES // (lane * itemsize)) // 8 * 8
    max_rows = max(max_rows, 8)
    if rows <= max_rows:
        # Single block == full array (exempt from the (8,128) divisibility rule).
        return rows
    cand = min(max_rows, (rows // 8) * 8)
    while cand >= 8:
        if rows % cand == 0:
            return cand
        cand -= 8
    return None


def module_forward(x: jax.Array) -> jax.Array:
    """Canonical forward for the abstract Module: identity, zero cost."""
    return x


def module_forward_copy(x: jax.Array) -> jax.Array:
    """Identity forward realized as a physical Pallas HBM->VMEM->HBM copy.

    Only use when a physical copy is explicitly required; otherwise prefer
    `module_forward` (plain `return x`, zero HBM traffic).
    """
    total = x.size
    if total == 0:
        return x

    itemsize = jnp.dtype(x.dtype).itemsize
    lane = _pick_lane(total)
    if lane is None:
        # TODO(synk): ragged sizes (not a multiple of 128 elements) would need
        # pad/slice passes or a masked-tail kernel; fall back to zero-cost
        # identity rather than paying 2 extra HBM passes.
        return x

    rows = total // lane
    tile_rows = _pick_tile_rows(rows, lane, itemsize)
    if tile_rows is None:
        # No clean tiling; fall back to zero-cost identity.
        return x
    grid_rows = rows // tile_rows

    # Contiguous reshape: metadata-only (no HBM pass), so the alias below is a
    # real alias of the caller's buffer rather than of a padded intermediate.
    x2d = x.reshape(rows, lane)

    out2d = pl.pallas_call(
        _identity_kernel,
        out_shape=jax.ShapeDtypeStruct((rows, lane), x.dtype),
        grid=(grid_rows,),
        in_specs=[pl.BlockSpec((tile_rows, lane), lambda i: (i, 0))],
        out_specs=pl.BlockSpec((tile_rows, lane), lambda i: (i, 0)),
        # Output buffer is the input buffer: no extra HBM allocation for the
        # identity result (XLA inserts a defensive copy only if the input
        # cannot be donated, which stays correct).
        input_output_aliases={0: 0},
        compiler_params=pltpu.CompilerParams(
            # Tiles are independent -> let v7x shard them across both TCs.
            dimension_semantics=("parallel",),
        ),
    )(x2d)

    return out2d.reshape(x.shape)


if __name__ == "__main__":
    key = jax.random.PRNGKey(0)
    # Small NCHW input consistent with a conv-style geonets module.
    x = jax.random.normal(key, (2, 4, 16, 16), dtype=jnp.float32)

    # Canonical zero-cost forward (abstract no-op -> identity).
    y_fast = module_forward(x)
    assert y_fast is x

    # Physical Pallas copy path (exercises the HBM -> VMEM -> HBM kernel).
    y = jax.jit(module_forward_copy)(x)
    jax.block_until_ready(y)

    # Sanity check: identity semantics.
    assert y.shape == x.shape
    assert y.dtype == x.dtype
    assert bool(jnp.allclose(y, x))

    print("KERNEL_OK")
</pallas_src>

<mosaic_0001>
module attributes {stable_mosaic.version = 11 : i64} {
  func.func @_identity_kernel(%arg0: i32, %arg1: memref<2x1024xf32, #tpu.memory_space<vmem>>, %arg2: memref<2x1024xf32, #tpu.memory_space<vmem>>) attributes {dimension_semantics = [#tpu.dimension_semantics<parallel>], iteration_bounds = array<i64: 1>, scalar_prefetch = 0 : i64, scratch_operands = 0 : i64, tpu.core_type = #tpu.core_type<tc>, window_params = [{transform_indices = @transform_0, window_bounds = array<i64: 2, 1024>}, {transform_indices = @transform_1, window_bounds = array<i64: 2, 1024>}]} {
    %c0 = arith.constant 0 : index
    %c0_0 = arith.constant 0 : index
    %0 = vector.load %arg1[%c0, %c0_0] : memref<2x1024xf32, #tpu.memory_space<vmem>>, vector<2x1024xf32>
    %c0_1 = arith.constant 0 : index
    %c0_2 = arith.constant 0 : index
    %1 = vector.load %arg2[%c0_1, %c0_2] : memref<2x1024xf32, #tpu.memory_space<vmem>>, vector<2x1024xf32>
    tpu.vector_store %arg2[%c0_1, %c0_2], %0 {strides = array<i32>} : memref<2x1024xf32, #tpu.memory_space<vmem>>, vector<2x1024xf32>,
    return
  }
  func.func @transform_0(%arg0: i32) -> (i32, i32) {
    %c0_i32 = arith.constant 0 : i32
    %c0_i32_0 = arith.constant 0 : i32
    return %arg0, %c0_i32 : i32, i32
  }
  func.func @transform_1(%arg0: i32) -> (i32, i32) {
    %c0_i32 = arith.constant 0 : i32
    %c0_i32_0 = arith.constant 0 : i32
    return %arg0, %c0_i32 : i32, i32
  }
}

</mosaic_0001>

<llo_original>
// kernel: module_forward_copy.1
$region0: #{module_forward_copy.1}
  #allocation0 [shape = 'u32[]', space=smem, size = 0x4, offset = 0x4, fixed_abs, tag = 'smem constant byte address 0x4 - core index']
  #allocation1 [shape = 'u32[144,128]{1,0:T(1,128)}', space=vmem, size = 0x12000, scoped, tag = 'internal scratch']
  %s0 = inlined_call_operand.vmem [shape: f32[2,1024], index: 0, kind: input, shape index: {}, may-alias: {0,1}]
  %s1 = inlined_call_operand.vmem [shape: f32[2,1024], index: 1, kind: output, shape index: {}, may-alias: {0,1}]
  %s2 = sld [smem:[#allocation0]]
  $region14: #{module_forward_copy.1} parent=0
    _
  %s4 = ssub.s32 1, %s2
  %s5 = scalar_select 0, %s4, %s2
  // Predicated region
  $region2: #{module_forward_copy.1} parent=0 // pred_check
    _
  $region3: #{module_forward_copy.1} parent=0 // pred_check_branch
    %7 = sbr.rel (0) target = $region5
  $region4: #{module_forward_copy.1} parent=0 // pred_region
    _
  $region5: #{module_forward_copy.1} parent=0 // pred_fallthru
    _
  %v8 = vld [vmem:[%s0] sm:$0xff]
  %v9 = vld [vmem:[%s0 + $0x8] sm:$0xff]
  %10 = vst [vmem:[%s1] sm:$0xff] %v8
  %11 = vst [vmem:[%s1 + $0x8] sm:$0xff] %v9
  // Predicated region
  $region6: #{module_forward_copy.1} parent=0 // pred_check
    _
  $region7: #{module_forward_copy.1} parent=0 // pred_check_branch
    %13 = sbr.rel (0) target = $region9
  $region8: #{module_forward_copy.1} parent=0 // pred_region
    _
  $region9: #{module_forward_copy.1} parent=0 // pred_fallthru
    _
  // Predicated region
  $region10: #{module_forward_copy.1} parent=0 // pred_check
    _
  $region11: #{module_forward_copy.1} parent=0 // pred_check_branch
    %15 = sbr.rel (0) target = $region13
  $region12: #{module_forward_copy.1} parent=0 // pred_region
    _
  $region13: #{module_forward_copy.1} parent=0 // pred_fallthru
    _

</llo_original>
